<compile_context>
chip_gen: v7x
topology: tpu7x:2x2x1
jax: 0.10.0
libtpu: 0.0.40
codegen_flags: <defaults>
</compile_context>

<pallas_src>
import math
from dataclasses import dataclass

import jax
import jax.numpy as jnp
from jax.experimental import pallas as pl
from jax.experimental.pallas import tpu as pltpu


@dataclass(frozen=True)
class MandoFanBeamConfig:
    views: int = 8            # sgmHeight
    detEltCount: int = 16     # sgmWidth
    detEltSize: float = 1.0
    detOffCenter: float = 0.0
    sid: float = 40.0
    sdd: float = 80.0
    imgDim: int = 16
    pixelSize: float = 1.0
    imgRot: float = 0.0       # degrees
    imgXCenter: float = 0.0
    imgYCenter: float = 0.0
    startAngle: float = 0.0   # degrees
    totalScanAngle: float = 360.0  # degrees
    fovCrop: bool = False


_MAX_BATCH_TILE = 256          # rows of sinogram per grid step (v6e/v7x MXU width)
_MAX_RESIDENT_K = 2048         # above this, tile the reduction (K) axis
_K_TILE = 512                  # reduction tile when K is tiled (multiple of 128)
_VMEM_BUDGET = 24 << 20        # target working set (under the 32 MiB scoped limit)
_VMEM_LIMIT = 32 << 20         # explicit scoped-VMEM limit (safe on v5e/v6e/v7x)


def _round_up(x: int, m: int) -> int:
    return ((x + m - 1) // m) * m


def _round_down(x: int, m: int) -> int:
    return (x // m) * m


# ----------------------------------------------------------------------------
# Host-side precomputation (batch-invariant)
# ----------------------------------------------------------------------------
def _ramp_filter_matrix(det: int, du: float) -> jnp.ndarray:
    """Toeplitz matrix H[k, u] = h_RL[u - k] for the discrete Ram-Lak kernel."""
    n = jnp.arange(det, dtype=jnp.int32)
    diff = n[None, :] - n[:, None]                       # u - k
    diff_f = diff.astype(jnp.float32)
    safe = jnp.where(diff == 0, 1.0, diff_f)
    odd = (jnp.abs(diff) % 2) == 1
    h = jnp.where(diff == 0,
                  1.0 / (4.0 * du * du),
                  jnp.where(odd,
                            -1.0 / (math.pi ** 2 * du * du * safe * safe),
                            0.0))
    return h.astype(jnp.float32)


def _build_system_matrix(cfg: MandoFanBeamConfig) -> jnp.ndarray:
    """Build A (views*det, imgDim^2), bf16, so that image_flat = sino_flat @ A.

    Folds: cosine pre-weighting, Ram-Lak ramp filtering (* du), 2-tap linear
    detector interpolation, the 1/U^2 fan-beam weight, the dbeta scale and
    the optional FOV crop mask.
    """
    V, D, N = cfg.views, cfg.detEltCount, cfg.imgDim
    du = float(cfg.detEltSize)
    sid, sdd = float(cfg.sid), float(cfg.sdd)
    off = float(cfg.detOffCenter)
    px = float(cfg.pixelSize)
    rot = math.radians(cfg.imgRot)
    xc, yc = float(cfg.imgXCenter), float(cfg.imgYCenter)
    start = math.radians(cfg.startAngle)
    dbeta = math.radians(cfg.totalScanAngle) / V

    # ---- filtering: raw detector k -> filtered detector u' -----------------
    H = _ramp_filter_matrix(D, du)                                 # (D_k, D_u')
    det_pos = (jnp.arange(D, dtype=jnp.float32) - (D - 1) / 2.0) * du + off
    cosw = sdd / jnp.sqrt(sdd * sdd + det_pos * det_pos)           # (D_k,)
    Hfull = (cosw[:, None] * H) * du                               # (D_k, D_u')
    HfullT = Hfull.T                                               # (D_u', D_k)

    # ---- backprojection geometry -------------------------------------------
    ii = jnp.arange(N, dtype=jnp.float32)
    jj = jnp.arange(N, dtype=jnp.float32)
    x0 = (jj[None, :] - (N - 1) / 2.0) * px + xc                   # (N, N)
    y0 = ((N - 1) / 2.0 - ii[:, None]) * px + yc                   # (N, N)
    cr, sr = math.cos(rot), math.sin(rot)
    xw = (x0 * cr - y0 * sr).reshape(-1)                           # (P,)
    yw = (x0 * sr + y0 * cr).reshape(-1)                           # (P,)

    betas = start + dbeta * jnp.arange(V, dtype=jnp.float32)       # (V,)
    cb, sb = jnp.cos(betas), jnp.sin(betas)
    t = xw[:, None] * cb[None, :] + yw[:, None] * sb[None, :]      # (P, V)
    d = sid + xw[:, None] * sb[None, :] - yw[:, None] * cb[None, :]
    u = sdd * t / d
    Uw = d / sid
    idx = (u - off) / du + (D - 1) / 2.0                           # (P, V)
    w = dbeta / (Uw * Uw)                                          # (P, V)

    # ---- sparse (2-tap) linear interpolation, gathered from HfullT ---------
    i0 = jnp.floor(idx).astype(jnp.int32)
    frac = idx - i0.astype(jnp.float32)
    lo_ok = (i0 >= 0) & (i0 <= D - 1)
    hi_ok = (i0 + 1 >= 0) & (i0 + 1 <= D - 1)
    i0c = jnp.clip(i0, 0, D - 1)
    i1c = jnp.clip(i0 + 1, 0, D - 1)
    w_lo = jnp.where(lo_ok, 1.0 - frac, 0.0) * w                   # (P, V)
    w_hi = jnp.where(hi_ok, frac, 0.0) * w                         # (P, V)

    A = (w_lo[:, :, None] * HfullT[i0c]
         + w_hi[:, :, None] * HfullT[i1c])                         # (P, V, D_k)

    if cfg.fovCrop:
        fov_r = sid * math.sin(math.atan2(D * du / 2.0, sdd))
        inside = ((xw * xw + yw * yw) <= fov_r * fov_r).astype(jnp.float32)
        A = A * inside[:, None, None]

    # (V*D, P), stored bf16 — f32 accumulation happens inside the kernel.
    return jnp.transpose(A.reshape(N * N, V * D)).astype(jnp.bfloat16)


# ----------------------------------------------------------------------------
# Tile selection (per-generation safe VMEM budget)
# ----------------------------------------------------------------------------
def _choose_tiles(batch: int, K: int, P: int):
    # batch tiling: balance tiles, <= _MAX_BATCH_TILE rows, multiple of 8
    n_b = max(1, -(-batch // _MAX_BATCH_TILE))
    b_tile = _round_up(-(-batch // n_b), 8)
    padded_batch = _round_up(batch, b_tile)

    # reduction (K) tiling: only when K is large
    if K <= _MAX_RESIDENT_K:
        k_tile, K_pad = K, K
    else:
        k_tile = _K_TILE
        K_pad = _round_up(K, k_tile)

    # pixel (lane) tiling from the VMEM budget:
    #   A: 2 * k_tile * p_tile * 2B (bf16, double buffered)
    #   out: 2 * b_tile * p_tile * 4B, acc: b_tile * p_tile * 4B
    #   sino (fixed): 2 * b_tile * k_tile * 4B
    P_pad0 = _round_up(P, 128)
    fixed = 2 * b_tile * k_tile * 4
    per_col = 2 * k_tile * 2 + 2 * b_tile * 4 + b_tile * 4
    avail = max(_VMEM_BUDGET - fixed, per_col * 128)
    p_tile = _round_down(avail // per_col, 128)
    p_tile = max(128, min(p_tile, P_pad0))
    # Give the outer ("parallel") axis >= 2 tiles so v7x's 2 TCs both get work.
    if P_pad0 >= 256 and p_tile >= P_pad0:
        p_tile = _round_up(P_pad0 // 2, 128)
    P_pad = _round_up(P_pad0, p_tile)

    return b_tile, padded_batch, k_tile, K_pad, p_tile, P_pad


# ----------------------------------------------------------------------------
# Pallas kernels
# ----------------------------------------------------------------------------
def _fbp_matmul_kernel(sino_ref, a_ref, out_ref):
    # bf16 A is upcast in-register; accumulation is f32 on the MXU.
    out_ref[...] = jnp.dot(sino_ref[...], a_ref[...].astype(jnp.float32),
                           preferred_element_type=jnp.float32)


def _fbp_matmul_acc_kernel(sino_ref, a_ref, out_ref, acc_ref):
    @pl.when(pl.program_id(2) == 0)
    def _():
        acc_ref[...] = jnp.zeros_like(acc_ref)

    acc_ref[...] += jnp.dot(sino_ref[...], a_ref[...].astype(jnp.float32),
                            preferred_element_type=jnp.float32)

    @pl.when(pl.program_id(2) == pl.num_programs(2) - 1)
    def _():
        out_ref[...] = acc_ref[...]


def mando_fanbeam_fbp(sinogram: jnp.ndarray,
                      cfg: MandoFanBeamConfig,
                      system_matrix: jnp.ndarray | None = None) -> jnp.ndarray:
    """sinogram: (..., views, det_count) -> image (..., imgDim, imgDim)."""
    lead = sinogram.shape[:-2]
    V, D, N = cfg.views, cfg.detEltCount, cfg.imgDim
    assert sinogram.shape[-2] == V and sinogram.shape[-1] == D
    K = V * D
    P = N * N

    if system_matrix is None:
        system_matrix = _build_system_matrix(cfg)

    batch = int(math.prod(lead)) if lead else 1
    x = sinogram.reshape(batch, K).astype(jnp.float32)

    b_tile, padded_batch, k_tile, K_pad, p_tile, P_pad = _choose_tiles(batch, K, P)

    if padded_batch != batch or K_pad != K:
        x = jnp.pad(x, ((0, padded_batch - batch), (0, K_pad - K)))
    A = system_matrix                                              # (K, P) bf16
    if K_pad != K or P_pad != P:
        A = jnp.pad(A, ((0, K_pad - K), (0, P_pad - P)))

    grid_p = P_pad // p_tile
    grid_b = padded_batch // b_tile
    n_k = K_pad // k_tile

    cost = pl.CostEstimate(
        flops=2 * padded_batch * K_pad * P_pad,
        transcendentals=0,
        bytes_accessed=(padded_batch * K_pad * 4
                        + K_pad * P_pad * 2
                        + padded_batch * P_pad * 4),
    )

    if n_k == 1:
        # A tile (index (0, p)) stays resident across the inner batch sweep.
        out = pl.pallas_call(
            _fbp_matmul_kernel,
            out_shape=jax.ShapeDtypeStruct((padded_batch, P_pad), jnp.float32),
            grid_spec=pltpu.PrefetchScalarGridSpec(
                num_scalar_prefetch=0,
                grid=(grid_p, grid_b),
                in_specs=[
                    pl.BlockSpec((b_tile, K_pad), lambda p, b: (b, 0)),
                    pl.BlockSpec((K_pad, p_tile), lambda p, b: (0, p)),
                ],
                out_specs=pl.BlockSpec((b_tile, p_tile), lambda p, b: (b, p)),
            ),
            compiler_params=pltpu.CompilerParams(
                dimension_semantics=("parallel", "parallel"),
                vmem_limit_bytes=_VMEM_LIMIT),
            cost_estimate=cost,
        )(x, A)
    else:
        # Large scan geometries: tile the reduction axis, accumulate in VMEM.
        out = pl.pallas_call(
            _fbp_matmul_acc_kernel,
            out_shape=jax.ShapeDtypeStruct((padded_batch, P_pad), jnp.float32),
            grid_spec=pltpu.PrefetchScalarGridSpec(
                num_scalar_prefetch=0,
                grid=(grid_p, grid_b, n_k),
                in_specs=[
                    pl.BlockSpec((b_tile, k_tile), lambda p, b, k: (b, k)),
                    pl.BlockSpec((k_tile, p_tile), lambda p, b, k: (k, p)),
                ],
                out_specs=pl.BlockSpec((b_tile, p_tile), lambda p, b, k: (b, p)),
                scratch_shapes=[pltpu.VMEM((b_tile, p_tile), jnp.float32)],
            ),
            compiler_params=pltpu.CompilerParams(
                dimension_semantics=("parallel", "parallel", "arbitrary"),
                vmem_limit_bytes=_VMEM_LIMIT),
            cost_estimate=cost,
        )(x, A)

    out = out[:batch, :P]
    return out.reshape(*lead, N, N)


class MandoFanbeamFbpLayer:
    """JAX analogue of the PyTorch MandoFanbeamFbpLayer module."""

    def __init__(self, cfg: MandoFanBeamConfig) -> None:
        self.cfg = cfg
        # Batch-invariant FBP system matrix, built once (bf16).
        self.system_matrix = _build_system_matrix(cfg)

    def __call__(self, x: jnp.ndarray) -> jnp.ndarray:
        return mando_fanbeam_fbp(x, self.cfg, system_matrix=self.system_matrix)


# ----------------------------------------------------------------------------
# Pure-JAX reference (mirrors the original per-view algorithm) for validation
# ----------------------------------------------------------------------------
def _reference_fbp(sino: jnp.ndarray, cfg: MandoFanBeamConfig) -> jnp.ndarray:
    V, D, N = cfg.views, cfg.detEltCount, cfg.imgDim
    du = float(cfg.detEltSize)
    sid, sdd = float(cfg.sid), float(cfg.sdd)
    off = float(cfg.detOffCenter)
    px = float(cfg.pixelSize)
    rot = math.radians(cfg.imgRot)
    xc, yc = float(cfg.imgXCenter), float(cfg.imgYCenter)
    start = math.radians(cfg.startAngle)
    dbeta = math.radians(cfg.totalScanAngle) / V

    lead = sino.shape[:-2]
    B = int(math.prod(lead)) if lead else 1
    s = sino.reshape(B, V, D).astype(jnp.float32)

    det_pos = (jnp.arange(D, dtype=jnp.float32) - (D - 1) / 2.0) * du + off
    cosw = sdd / jnp.sqrt(sdd * sdd + det_pos * det_pos)
    H = _ramp_filter_matrix(D, du)
    filt = jnp.einsum('bvk,ku->bvu', s * cosw, H,
                      precision=jax.lax.Precision.HIGHEST) * du

    ii = jnp.arange(N, dtype=jnp.float32)
    jj = jnp.arange(N, dtype=jnp.float32)
    x0 = (jj[None, :] - (N - 1) / 2.0) * px + xc
    y0 = ((N - 1) / 2.0 - ii[:, None]) * px + yc
    cr, sr = math.cos(rot), math.sin(rot)
    xw = x0 * cr - y0 * sr
    yw = x0 * sr + y0 * cr
    det_ids = jnp.arange(D, dtype=jnp.float32)

    acc = jnp.zeros((B, N, N), jnp.float32)
    for v in range(V):
        beta = start + v * dbeta
        cb, sb = math.cos(beta), math.sin(beta)
        t = xw * cb + yw * sb
        d = sid + xw * sb - yw * cb
        u = sdd * t / d
        Uw = d / sid
        idx = (u - off) / du + (D - 1) / 2.0
        hat = jnp.maximum(0.0, 1.0 - jnp.abs(idx[:, :, None] - det_ids))
        interp = jnp.einsum('ijd,bd->bij', hat, filt[:, v, :],
                            precision=jax.lax.Precision.HIGHEST)
        acc = acc + interp / (Uw * Uw)[None]
    img = acc * dbeta
    if cfg.fovCrop:
        fov_r = sid * math.sin(math.atan2(D * du / 2.0, sdd))
        img = jnp.where((xw * xw + yw * yw) <= fov_r * fov_r, img, 0.0)
    return img.reshape(*lead, N, N)


if __name__ == "__main__":
    cfg = MandoFanBeamConfig(
        views=8, detEltCount=16, detEltSize=1.0, detOffCenter=0.0,
        sid=40.0, sdd=80.0, imgDim=16, pixelSize=1.0,
        imgRot=0.0, imgXCenter=0.0, imgYCenter=0.0,
        startAngle=0.0, totalScanAngle=360.0, fovCrop=False,
    )
    layer = MandoFanbeamFbpLayer(cfg)

    key = jax.random.PRNGKey(0)
    # sinogram with extra leading dims (batch=2, channels=4), views=8, det=16
    x = jax.random.normal(key, (2, 4, cfg.views, cfg.detEltCount), dtype=jnp.float32)

    img = layer(x)
    jax.block_until_ready(img)
    assert img.shape == (2, 4, cfg.imgDim, cfg.imgDim)
    assert img.dtype == jnp.float32

    ref = _reference_fbp(x, cfg)
    jax.block_until_ready(ref)
    max_err = float(jnp.max(jnp.abs(img - ref)))
    # bf16 system matrix with f32 accumulation: tolerance accounts for A quantization.
    assert jnp.allclose(img, ref, atol=2e-2, rtol=2e-2), f"max_err={max_err}"

    print("KERNEL_OK")
</pallas_src>

<mosaic_0001>
module attributes {stable_mosaic.version = 11 : i64} {
  func.func @_fbp_matmul_kernel(%arg0: i32, %arg1: i32, %arg2: memref<8x128xf32, #tpu.memory_space<vmem>>, %arg3: memref<128x128xbf16, #tpu.memory_space<vmem>>, %arg4: memref<8x128xf32, #tpu.memory_space<vmem>>) attributes {dimension_semantics = [#tpu.dimension_semantics<parallel>, #tpu.dimension_semantics<parallel>], iteration_bounds = array<i64: 2, 1>, scalar_prefetch = 0 : i64, scratch_operands = 0 : i64, tpu.core_type = #tpu.core_type<tc>, window_params = [{transform_indices = @transform_0, window_bounds = array<i64: 8, 128>}, {transform_indices = @transform_1, window_bounds = array<i64: 128, 128>}, {transform_indices = @transform_2, window_bounds = array<i64: 8, 128>}]} {
    %c0 = arith.constant 0 : index
    %c0_0 = arith.constant 0 : index
    %0 = vector.load %arg2[%c0, %c0_0] : memref<8x128xf32, #tpu.memory_space<vmem>>, vector<8x128xf32>
    %c0_1 = arith.constant 0 : index
    %c0_2 = arith.constant 0 : index
    %1 = vector.load %arg3[%c0_1, %c0_2] : memref<128x128xbf16, #tpu.memory_space<vmem>>, vector<128x128xbf16>
    %2 = arith.extf %1 : vector<128x128xbf16> to vector<128x128xf32>
    %cst = arith.constant dense<0.000000e+00> : vector<8x128xf32>
    %3 = tpu.matmul %0, %2, %cst {dimension_numbers = #tpu.dot_dimension_numbers<[1], [0], [0], [1], [0, 0, 1, 1], [], []>} : vector<8x128xf32>, vector<128x128xf32>, vector<8x128xf32> -> vector<8x128xf32>
    %c0_3 = arith.constant 0 : index
    %c0_4 = arith.constant 0 : index
    %4 = vector.load %arg4[%c0_3, %c0_4] : memref<8x128xf32, #tpu.memory_space<vmem>>, vector<8x128xf32>
    tpu.vector_store %arg4[%c0_3, %c0_4], %3 {strides = array<i32>} : memref<8x128xf32, #tpu.memory_space<vmem>>, vector<8x128xf32>,
    return
  }
  func.func @transform_0(%arg0: i32, %arg1: i32) -> (i32, i32) {
    %c0_i32 = arith.constant 0 : i32
    %c0_i32_0 = arith.constant 0 : i32
    return %arg1, %c0_i32 : i32, i32
  }
  func.func @transform_1(%arg0: i32, %arg1: i32) -> (i32, i32) {
    %c0_i32 = arith.constant 0 : i32
    %c0_i32_0 = arith.constant 0 : i32
    return %c0_i32, %arg0 : i32, i32
  }
  func.func @transform_2(%arg0: i32, %arg1: i32) -> (i32, i32) {
    %c0_i32 = arith.constant 0 : i32
    return %arg1, %arg0 : i32, i32
  }
}

</mosaic_0001>

<llo_original>
// kernel: tpu_custom_call.1
$region0: #{tpu_custom_call.1}
  #allocation0 [shape = 'u32[]', space=smem, size = 0x4, offset = 0x4, fixed_abs, tag = 'smem constant byte address 0x4 - core index']
  #allocation1 [shape = 'u32[144,128]{1,0:T(1,128)}', space=vmem, size = 0x12000, scoped, tag = 'internal scratch']
  %s0 = inlined_call_operand.hbm [shape: f32[8,128], index: 0, kind: input, shape index: {}]
  %s1 = inlined_call_operand.hbm [shape: bf16[128,256], index: 1, kind: input, shape index: {}]
  %s2 = inlined_call_operand.hbm [shape: f32[8,256], index: 2, kind: output, shape index: {}]
  %s3 = sld [smem:[#allocation0]]
  $region49: #{tpu_custom_call.1} parent=0
    _
  %s5 = ssub.s32 1, %s3
  %s6 = scalar_select 0, %s5, %s3
  $region1: #{tpu_custom_call.1} parent=0
    #allocation2 [shape = 'u8[4096]{0}', space=vmem, size = 0x1000, scoped, tag = 'input window, operand 0, single buffered']
    #allocation3 [shape = 's32[2]{0}', space=sflag, size = 0x8, scoped, tag = 'scoped memory for tpu_custom_call.1']
    #allocation4 [shape = 's32[2]{0}', space=sflag, size = 0x8, scoped, tag = 'scoped memory for tpu_custom_call.1']
    #allocation5 [shape = 'u8[65536]{0}', space=vmem, size = 0x10000, scoped, tag = 'input window, operand 1']
    #allocation6 [shape = 's32[2]{0}', space=sflag, size = 0x8, scoped, tag = 'scoped memory for tpu_custom_call.1']
    #allocation7 [shape = 'u8[8192]{0}', space=vmem, size = 0x2000, scoped, tag = 'output window, operand 0']
    %7 = vsyncpa [#allocation3], 0
    %8 = vsyncpa [#allocation6], 0
    %s9 = scalar_lea.sflag [#allocation6], 1
    %10 = vsyncpa %s9, 0
    %11 = vsyncpa [#allocation4], 0
    %s12 = scalar_lea.sflag [#allocation4], 1
    %13 = vsyncpa %s12, 0
    loop: start=0, step=1, limit=4
    $region2: #{tpu_custom_call.1} parent=1 // loop_pre_header
      _
    $region3: #{tpu_custom_call.1} parent=1 // loop_header
      %s15 = sphi 0, %s19
      %p16 = scmp.ge.s32.totalorder %s15, 4
      %s22 = sphi 0, %s34
      %s23 = sphi 0, %s30
      %s24 = sphi 0, %s22
      %s25 = sphi 0, %s23
      %s26 = sphi 0, %s24
      %s27 = sphi 0, %s25
      %s37 = sphi 0, %s39
      %s40 = sphi 0, %s37
      %s41 = sphi 0, %s40
      %s57 = sphi 0, %s41
      %s63 = sphi 0, %s65
      %s66 = sphi 0, %s63
      %s67 = sphi 0, %s66
      %s83 = sphi 0, %s67
      %s91 = sphi 0, %s93
      %s94 = sphi 0, %s91
      %s95 = sphi 0, %s94
      %s111 = sphi 0, %s95
    $region4: #{tpu_custom_call.1} parent=1 // loop_header_branch
      %18 = sbr.rel (%p16) target = $region8
    $region5: #{tpu_custom_call.1} parent=1 // loop_body
      %s20 = ssub.s32 %s15, 1
      %s21 = ssub.s32 %s15, 2
      %s28 = sadd.s32 1, %s23
      %p29 = scmp.ge.s32.totalorder %s28, 1
      %s30 = scalar_select %p29, 0, %s28
      %s31 = sadd.s32 1, %s22
      %s32 = scalar_select %p29, %s31, %s22
      %p33 = scmp.ge.s32.totalorder %s32, 2
      %s34 = scalar_select %p33, 0, %s32
      %s35 = ssub.s32 %s23, %s30
      %p36 = scmp.eq.s32.totalorder %s35, 0
      %s38 = sadd.s32 %s37, 1
      %s39 = scalar_select %p36, %s37, %s38
      %p42 = pneg %p36
      %p43 = scmp.eq.s32.totalorder %s15, 1
      %p44 = por %p42, %p43
      %p45 = scmp.ne.s32.totalorder %s37, %s40
      %p46 = scmp.eq.s32.totalorder %s15, 0
      %p47 = por %p45, %p46
      %p48 = scmp.ne.s32.totalorder %s37, %s40
      %p49 = scmp.eq.s32.totalorder %s20, 1
      %p50 = por %p48, %p49
      %p51 = scmp.ne.s32.totalorder %s40, %s41
      %p52 = scmp.eq.s32.totalorder %s20, 0
      %p53 = por %p51, %p52
      %p54 = scmp.ne.s32.totalorder %s40, %s41
      %p55 = scmp.eq.s32.totalorder %s21, 1
      %p56 = por %p54, %p55
      %p58 = scmp.ne.s32.totalorder %s41, %s57
      %p59 = scmp.eq.s32.totalorder %s21, 0
      %p60 = por %p58, %p59
      %s61 = ssub.s32 %s22, %s34
      %p62 = scmp.eq.s32.totalorder %s61, 0
      %s64 = sadd.s32 %s63, 1
      %s65 = scalar_select %p62, %s63, %s64
      %p68 = pneg %p62
      %p69 = scmp.eq.s32.totalorder %s15, 1
      %p70 = por %p68, %p69
      %p71 = scmp.ne.s32.totalorder %s63, %s66
      %p72 = scmp.eq.s32.totalorder %s15, 0
      %p73 = por %p71, %p72
      %p74 = scmp.ne.s32.totalorder %s63, %s66
      %p75 = scmp.eq.s32.totalorder %s20, 1
      %p76 = por %p74, %p75
      %p77 = scmp.ne.s32.totalorder %s66, %s67
      %p78 = scmp.eq.s32.totalorder %s20, 0
      %p79 = por %p77, %p78
      %p80 = scmp.ne.s32.totalorder %s66, %s67
      %p81 = scmp.eq.s32.totalorder %s21, 1
      %p82 = por %p80, %p81
      %p84 = scmp.ne.s32.totalorder %s67, %s83
      %p85 = scmp.eq.s32.totalorder %s21, 0
      %p86 = por %p84, %p85
      %s87 = ssub.s32 %s23, %s30
      %s88 = ssub.s32 %s22, %s34
      %s89 = sor.u32 %s87, %s88
      %p90 = scmp.eq.s32.totalorder %s89, 0
      %s92 = sadd.s32 %s91, 1
      %s93 = scalar_select %p90, %s91, %s92
      %p96 = pneg %p90
      %p97 = scmp.eq.s32.totalorder %s15, 1
      %p98 = por %p96, %p97
      %p99 = scmp.ne.s32.totalorder %s91, %s94
      %p100 = scmp.eq.s32.totalorder %s15, 0
      %p101 = por %p99, %p100
      %p102 = scmp.ne.s32.totalorder %s91, %s94
      %p103 = scmp.eq.s32.totalorder %s20, 1
      %p104 = por %p102, %p103
      %p105 = scmp.ne.s32.totalorder %s94, %s95
      %p106 = scmp.eq.s32.totalorder %s20, 0
      %p107 = por %p105, %p106
      %p108 = scmp.ne.s32.totalorder %s94, %s95
      %p109 = scmp.eq.s32.totalorder %s21, 1
      %p110 = por %p108, %p109
      %p112 = scmp.ne.s32.totalorder %s95, %s111
      %p113 = scmp.eq.s32.totalorder %s21, 0
      %p114 = por %p112, %p113
      %p115 = scmp.le.s32.totalorder 1, %s15
      %p116 = scmp.lt.s32.totalorder %s15, 3
      %p117 = pnand %p115, %p116
      %p118 = pneg %p117
      // Predicated region
      $region9: #{tpu_custom_call.1} parent=5 // pred_check
        _
      $region10: #{tpu_custom_call.1} parent=5 // pred_check_branch
        %120 = sbr.rel (%p117) target = $region12
      $region11: #{tpu_custom_call.1} parent=5 // pred_region
        %s121 = ssub.s32 %s15, 1
        // Predicated region
        $region13: #{tpu_custom_call.1} parent=11 // pred_check
          %p122 = pneg %p53
        $region14: #{tpu_custom_call.1} parent=11 // pred_check_branch
          %124 = sbr.rel (%p122) target = $region16
        $region15: #{tpu_custom_call.1} parent=11 // pred_region
          %s126 = ssub.s32 128, 128
          %127 = vsyncadd [#allocation3], %s126
          %s128 = smul.addr %s25, 128
          %s129 = scalar_lea.hbm %s0, %s128
          %s131 = sshll.u32 [#allocation2], 4
          %s132 = int_to_ptr.vmem [resolvable:$true] %s131
          %134 = dma.hbm_to_vmem [thread:$0]  %s129, 128, %s132, [#allocation3]
        $region16: #{tpu_custom_call.1} parent=11 // pred_fallthru
          _
      $region12: #{tpu_custom_call.1} parent=5 // pred_fallthru
        _
      %p135 = scmp.lt.s32.totalorder %s15, 2
      // Predicated region
      $region17: #{tpu_custom_call.1} parent=5 // pred_check
        %p136 = pneg %p135
      $region18: #{tpu_custom_call.1} parent=5 // pred_check_branch
        %138 = sbr.rel (%p136) target = $region20
      $region19: #{tpu_custom_call.1} parent=5 // pred_region
        // Predicated region
        $region21: #{tpu_custom_call.1} parent=19 // pred_check
          %p139 = pneg %p73
        $region22: #{tpu_custom_call.1} parent=19 // pred_check_branch
          %141 = sbr.rel (%p139) target = $region24
        $region23: #{tpu_custom_call.1} parent=19 // pred_region
          %s142 = sand.u32 %s63, 1
          %s143 = scalar_lea.sflag [#allocation6], %s142
          %s144 = sand.u32 %s63, 1
          %s145 = smul.addr %s144, 64
          %s146 = scalar_lea.vmem [#allocation5], %s145
          %s148 = ssub.s32 1024, 1024
          %149 = vsyncadd %s143, %s148
          %s150 = smul.addr %s22, 64
          %s151 = scalar_lea.hbm %s1, %s150
          %s152 = sshll.u32 %s146, 4
          %s153 = int_to_ptr.vmem [resolvable:$true] %s152
          %158 = dma.hbm_to_vmem [thread:$0]  %s151, 1024, %s153, %s143, 128, 64, 4
        $region24: #{tpu_custom_call.1} parent=19 // pred_fallthru
          _
      $region20: #{tpu_custom_call.1} parent=5 // pred_fallthru
        _
      %p159 = scmp.le.s32.totalorder 1, %s15
      %p160 = scmp.lt.s32.totalorder %s15, 3
      %p161 = pnand %p159, %p160
      %p162 = pneg %p161
      // Predicated region
      $region25: #{tpu_custom_call.1} parent=5 // pred_check
        _
      $region26: #{tpu_custom_call.1} parent=5 // pred_check_branch
        %164 = sbr.rel (%p161) target = $region28
      $region27: #{tpu_custom_call.1} parent=5 // pred_region
        %s165 = ssub.s32 %s15, 1
        // Predicated region
        $region29: #{tpu_custom_call.1} parent=27 // pred_check
          %p166 = pneg %p53
        $region30: #{tpu_custom_call.1} parent=27 // pred_check_branch
          %168 = sbr.rel (%p166) target = $region32
        $region31: #{tpu_custom_call.1} parent=27 // pred_region
          %169 = dma.done [#allocation3], 128
        $region32: #{tpu_custom_call.1} parent=27 // pred_fallthru
          _
        %s170 = sand.u32 %s66, 1
        %s171 = scalar_lea.sflag [#allocation6], %s170
        %s172 = sand.u32 %s66, 1
        %s173 = smul.addr %s172, 64
        %s174 = scalar_lea.vmem [#allocation5], %s173
        // Predicated region
        $region33: #{tpu_custom_call.1} parent=27 // pred_check
          %p175 = pneg %p79
        $region34: #{tpu_custom_call.1} parent=27 // pred_check_branch
          %177 = sbr.rel (%p175) target = $region36
        $region35: #{tpu_custom_call.1} parent=27 // pred_region
          %178 = dma.done %s171, 1024
        $region36: #{tpu_custom_call.1} parent=27 // pred_fallthru
          _
        %p179 = pneg %p53
        %p180 = pneg %p50
        %s181 = sand.u32 %s66, 1
        %s182 = scalar_lea.sflag [#allocation6], %s181
        %s183 = sand.u32 %s66, 1
        %s184 = smul.addr %s183, 64
        %s185 = scalar_lea.vmem [#allocation5], %s184
        %p186 = pneg %p79
        %p187 = pneg %p76
        %p188 = pneg %p107
        %p189 = pneg %p104
        %s190 = sand.u32 %s94, 1
        %s191 = scalar_lea.sflag [#allocation4], %s190
        %s192 = sand.u32 %s94, 1
        %s193 = smul.addr %s192, 8
        %s194 = scalar_lea.vmem [#allocation7], %s193
        %v195 = vld [vmem:[#allocation2] sm:$0xff]
        %v196 = vld [vmem:[%s174] sm:$0xf]
        %v197 = vld [vmem:[%s174 + $0x4] sm:$0xf]
        %v198 = vld [vmem:[%s174 + $0x8] sm:$0xf]
        %v199 = vld [vmem:[%s174 + $0xc] sm:$0xf]
        %v200 = vld [vmem:[%s174 + $0x10] sm:$0xf]
        %v201 = vld [vmem:[%s174 + $0x14] sm:$0xf]
        %v202 = vld [vmem:[%s174 + $0x18] sm:$0xf]
        %v203 = vld [vmem:[%s174 + $0x1c] sm:$0xf]
        %v204 = vld [vmem:[%s174 + $0x20] sm:$0xf]
        %v205 = vld [vmem:[%s174 + $0x24] sm:$0xf]
        %v206 = vld [vmem:[%s174 + $0x28] sm:$0xf]
        %v207 = vld [vmem:[%s174 + $0x2c] sm:$0xf]
        %v208 = vld [vmem:[%s174 + $0x30] sm:$0xf]
        %v209 = vld [vmem:[%s174 + $0x34] sm:$0xf]
        %v210 = vld [vmem:[%s174 + $0x38] sm:$0xf]
        %v211 = vld [vmem:[%s174 + $0x3c] sm:$0xf]
        %v212 = vunpack.c.l.bf16 %v196
        %v213 = vunpack.c.l.bf16 %v197
        %v214 = vunpack.c.l.bf16 %v198
        %v215 = vunpack.c.l.bf16 %v199
        %v216 = vunpack.c.l.bf16 %v200
        %v217 = vunpack.c.l.bf16 %v201
        %v218 = vunpack.c.l.bf16 %v202
        %v219 = vunpack.c.l.bf16 %v203
        %v220 = vunpack.c.l.bf16 %v204
        %v221 = vunpack.c.l.bf16 %v205
        %v222 = vunpack.c.l.bf16 %v206
        %v223 = vunpack.c.l.bf16 %v207
        %v224 = vunpack.c.l.bf16 %v208
        %v225 = vunpack.c.l.bf16 %v209
        %v226 = vunpack.c.l.bf16 %v210
        %v227 = vunpack.c.l.bf16 %v211
        %228 = vmatprep.subr.mxu0 0.0
        %229 = vmatpush1.msra.mxu0 %v212
        %230 = vmatprep.subr.mxu0 0.0
        %231 = vmatpush1.msra.mxu0 %v213
        %232 = vmatprep.subr.mxu0 0.0
        %233 = vmatpush1.msra.mxu0 %v214
        %234 = vmatprep.subr.mxu0 0.0
        %235 = vmatpush1.msra.mxu0 %v215
        %236 = vmatprep.subr.mxu0 0.0
        %237 = vmatpush1.msra.mxu0 %v216
        %238 = vmatprep.subr.mxu0 0.0
        %239 = vmatpush1.msra.mxu0 %v217
        %240 = vmatprep.subr.mxu0 0.0
        %241 = vmatpush1.msra.mxu0 %v218
        %242 = vmatprep.subr.mxu0 0.0
        %243 = vmatpush1.msra.mxu0 %v219
        %244 = vmatprep.subr.mxu0 0.0
        %245 = vmatpush1.msra.mxu0 %v220
        %246 = vmatprep.subr.mxu0 0.0
        %247 = vmatpush1.msra.mxu0 %v221
        %248 = vmatprep.subr.mxu0 0.0
        %249 = vmatpush1.msra.mxu0 %v222
        %250 = vmatprep.subr.mxu0 0.0
        %251 = vmatpush1.msra.mxu0 %v223
        %252 = vmatprep.subr.mxu0 0.0
        %253 = vmatpush1.msra.mxu0 %v224
        %254 = vmatprep.subr.mxu0 0.0
        %255 = vmatpush1.msra.mxu0 %v225
        %256 = vmatprep.subr.mxu0 0.0
        %257 = vmatpush1.msra.mxu0 %v226
        %258 = vmatprep.subr.mxu0 0.0
        %259 = vmatpush1.msra.mxu0 %v227
        %260 = vmatprep.subr.mxu0 0.0
        %261 = vmatpush1.msra.mxu0 0.0
        %262 = vmatprep.subr.mxu0 0.0
        %263 = vmatpush1.msra.mxu0 0.0
        %264 = vmatprep.subr.mxu0 0.0
        %265 = vmatpush1.msra.mxu0 0.0
        %266 = vmatprep.subr.mxu0 0.0
        %267 = vmatpush1.msra.mxu0 0.0
        %268 = vmatprep.subr.mxu0 0.0
        %269 = vmatpush1.msra.mxu0 0.0
        %270 = vmatprep.subr.mxu0 0.0
        %271 = vmatpush1.msra.mxu0 0.0
        %272 = vmatprep.subr.mxu0 0.0
        %273 = vmatpush1.msra.mxu0 0.0
        %274 = vmatprep.subr.mxu0 0.0
        %275 = vmatpush1.msra.mxu0 0.0
        %276 = vmatprep.subr.mxu0 0.0
        %277 = vmatpush1.msra.mxu0 0.0
        %278 = vmatprep.subr.mxu0 0.0
        %279 = vmatpush1.msra.mxu0 0.0
        %280 = vmatprep.subr.mxu0 0.0
        %281 = vmatpush1.msra.mxu0 0.0
        %282 = vmatprep.subr.mxu0 0.0
        %283 = vmatpush1.msra.mxu0 0.0
        %284 = vmatprep.subr.mxu0 0.0
        %285 = vmatpush1.msra.mxu0 0.0
        %286 = vmatprep.subr.mxu0 0.0
        %287 = vmatpush1.msra.mxu0 0.0
        %288 = vmatprep.subr.mxu0 0.0
        %289 = vmatpush1.msra.mxu0 0.0
        %290 = vmatprep.subr.mxu0 0.0
        %291 = vmatpush1.msra.mxu0 0.0
        %292 = vmatprep.mubr.f32.mxu0 0.0
        %293 = vmatmul.mubr.f32.gmra.mrb[0].mxu0 %v195
        %v294 = vpop.f32.mrb[0].mxu0
        %v295 = vadd.f32 0.0, %v294
        %v296 = vpop.f32.mrb[0].mxu0
        %297 = vdwg.mxu0
        %298 = vst [vmem:[%s194] sm:$0xff] %v295
        %s299 = sand.u32 %s94, 1
        %s300 = scalar_lea.sflag [#allocation4], %s299
        %s301 = sand.u32 %s94, 1
        %s302 = smul.addr %s301, 8
        %s303 = scalar_lea.vmem [#allocation7], %s302
        // Predicated region
        $region37: #{tpu_custom_call.1} parent=27 // pred_check
          %p304 = pneg %p104
        $region38: #{tpu_custom_call.1} parent=27 // pred_check_branch
          %306 = sbr.rel (%p304) target = $region40
        $region39: #{tpu_custom_call.1} parent=27 // pred_region
          %s308 = ssub.s32 128, 128
          %309 = vsyncadd %s300, %s308
          %s310 = smul.addr %s25, 2
          %s311 = sadd.s32 %s24, %s310
          %s312 = smul.addr %s311, 128
          %s313 = scalar_lea.hbm %s2, %s312
          %s315 = sshll.u32 %s303, 4
          %s316 = int_to_ptr.vmem [resolvable:$true] %s315
          %318 = dma.vmem_to_hbm [thread:$0]  %s316, 128, %s313, %s300
        $region40: #{tpu_custom_call.1} parent=27 // pred_fallthru
          _
      $region28: #{tpu_custom_call.1} parent=5 // pred_fallthru
        _
      %p319 = scmp.le.s32.totalorder 2, %s15
      // Predicated region
      $region41: #{tpu_custom_call.1} parent=5 // pred_check
        %p320 = pneg %p319
      $region42: #{tpu_custom_call.1} parent=5 // pred_check_branch
        %322 = sbr.rel (%p320) target = $region44
      $region43: #{tpu_custom_call.1} parent=5 // pred_region
        %s323 = ssub.s32 %s15, 2
        // Predicated region
        $region45: #{tpu_custom_call.1} parent=43 // pred_check
          %p324 = pneg %p110
        $region46: #{tpu_custom_call.1} parent=43 // pred_check_branch
          %326 = sbr.rel (%p324) target = $region48
        $region47: #{tpu_custom_call.1} parent=43 // pred_region
          %s327 = sand.u32 %s95, 1
          %s328 = scalar_lea.sflag [#allocation4], %s327
          %s329 = sand.u32 %s95, 1
          %s330 = smul.addr %s329, 8
          %s331 = scalar_lea.vmem [#allocation7], %s330
          %332 = dma.done %s328, 128
        $region48: #{tpu_custom_call.1} parent=43 // pred_fallthru
          _
      $region44: #{tpu_custom_call.1} parent=5 // pred_fallthru
        _
    $region6: #{tpu_custom_call.1} parent=1 // loop_footer
      %s19 = sadd.s32 1, %s15
    $region7: #{tpu_custom_call.1} parent=1 // loop_footer_branch
      %14 = sbr.rel target = $region3
    $region8: #{tpu_custom_call.1} parent=1 // loop_exit
      _
    %333 = vsyncpa [#allocation3], 1
    %s334 = scalar_lea.sflag [#allocation3], 1
    %335 = vsyncpa %s334, 1
    %336 = vsyncpa [#allocation6], 1
    %s337 = scalar_lea.sflag [#allocation6], 1
    %338 = vsyncpa %s337, 1
    %339 = vsyncpa [#allocation4], 1
    %s340 = scalar_lea.sflag [#allocation4], 1
    %341 = vsyncpa %s340, 1

</llo_original>
